<compile_context>
chip_gen: v7x
topology: tpu7x:2x2x1
jax: 0.10.0
libtpu: 0.0.40
codegen_flags: <defaults>
</compile_context>

<pallas_src>
import jax
import jax.numpy as jnp
from jax import lax
from jax.experimental import pallas as pl
from jax.experimental.pallas import tpu as pltpu

LANE = 128            # batch elements per slab row (each element uses 2 lanes)
WIDTH = 2 * LANE      # slab lane width (x1/x2 interleaved)
ROW_TILE = 2048       # max rows per grid step: 2048*256*4 B = 2 MiB per buffer


def _cdiv(a, b):
    return -(-a // b)


def _round_up(a, b):
    return _cdiv(a, b) * b


def poly_width2_kernel(coef_ref, x_ref, o_ref):
    """coef_ref: (12,) f32 SMEM = [a1,b1,c1,d1,e1,f1, a2,b2,c2,d2,e2,f2].

    x_ref / o_ref: (row_tile, 2*LANE) f32 VMEM, batch-interleaved on lanes:
      lane 2k   -> x1 / n1 of one batch element
      lane 2k+1 -> x2 / n2 of the same batch element
    """
    x = x_ref[...]
    a1, b1, c1, d1, e1, f1 = (coef_ref[k] for k in range(6))
    a2, b2, c2, d2, e2, f2 = (coef_ref[k] for k in range(6, 12))

    width = x.shape[-1]
    # Lane-neighbour values via XLU rotations (idle unit here).  Wrapped-around
    # elements at lanes 0 / width-1 are never selected by the parity mask.
    x_left = pltpu.roll(x, 1, axis=1)            # x_left[i]  = x[i-1]
    x_right = pltpu.roll(x, width - 1, axis=1)   # x_right[i] = x[i+1]

    # poly(x1,x2) = a*x1^2 + b*x1*x2 + c*x2^2 + d*x1 + e*x2 + f   (Horner, VPU)
    # Even lanes: (x1, x2) = (x, x_right)  -> neuron 1
    # Odd  lanes: (x1, x2) = (x_left, x)   -> neuron 2
    n1 = (a1 * x + b1 * x_right + d1) * x + (c1 * x_right + e1) * x_right + f1
    n2 = (a2 * x_left + b2 * x + d2) * x_left + (c2 * x + e2) * x + f2

    lane = lax.broadcasted_iota(jnp.int32, x.shape, dimension=1)
    o_ref[...] = jnp.where(lane % 2 == 0, n1, n2)


def _quad_coeffs(W):
    """3x3 weight -> 6 coefficients of the quadratic form over z=[x1,x2,1]."""
    W = W.astype(jnp.float32)
    return jnp.stack([
        W[0, 0],
        W[0, 1] + W[1, 0],
        W[1, 1],
        W[0, 2] + W[2, 0],
        W[1, 2] + W[2, 1],
        W[2, 2],
    ])


def polynomial_width2_forward(x, W1, W2, *, use_pallas=None):
    """x: (B, 2), W1/W2: (3, 3)  ->  (B, 2), matching PolynomialWidth2.forward."""
    B = x.shape[0]
    x = x.astype(jnp.float32)
    coeffs = jnp.concatenate([_quad_coeffs(W1), _quad_coeffs(W2)])  # (12,)

    if use_pallas is None:
        # Tiny batches: fixed launch + (8,128) slab padding dominates; the same
        # 6-coefficient polynomial as a fused XLA elementwise op is faster.
        use_pallas = B >= 4096

    if not use_pallas:
        x1, x2 = x[:, 0], x[:, 1]
        c = coeffs
        n1 = (c[0] * x1 + c[1] * x2 + c[3]) * x1 + (c[2] * x2 + c[4]) * x2 + c[5]
        n2 = (c[6] * x1 + c[7] * x2 + c[9]) * x1 + (c[8] * x2 + c[10]) * x2 + c[11]
        return jnp.stack([n1, n2], axis=1)

    # ---- Pallas path: one interleaved, lane-dense slab in / out. ----
    n_rows = _cdiv(B, LANE)
    n_rows8 = _round_up(n_rows, 8)                       # sublane align
    # >= 2 grid steps whenever there is enough work (v7x megacore sharding);
    # tail padding is at most 8 rows per call.
    n_tiles = 1 if n_rows8 <= 8 else max(2, _cdiv(n_rows8, ROW_TILE))
    row_tile = _round_up(_cdiv(n_rows8, n_tiles), 8)
    n_rows_pad = n_tiles * row_tile

    flat = x.reshape(-1)                  # row-major: x1_0, x2_0, x1_1, x2_1...
    pad = n_rows_pad * WIDTH - flat.shape[0]
    if pad:
        flat = jnp.pad(flat, (0, pad))
    slab = flat.reshape(n_rows_pad, WIDTH)   # pure metadata reshape

    slab_spec = pl.BlockSpec((row_tile, WIDTH), lambda i: (i, 0))
    n_elems = n_rows_pad * WIDTH

    out = pl.pallas_call(
        poly_width2_kernel,
        out_shape=jax.ShapeDtypeStruct((n_rows_pad, WIDTH), jnp.float32),
        grid_spec=pltpu.PrefetchScalarGridSpec(
            num_scalar_prefetch=0,
            grid=(n_tiles,),
            in_specs=[
                pl.BlockSpec(memory_space=pltpu.MemorySpace.SMEM),  # coeffs
                slab_spec,                                          # x slab
            ],
            out_specs=slab_spec,
        ),
        compiler_params=pltpu.CompilerParams(
            dimension_semantics=("parallel",),
        ),
        cost_estimate=pl.CostEstimate(
            flops=22 * n_elems, transcendentals=0, bytes_accessed=8 * n_elems),
    )(coeffs, slab)

    flat_out = out.reshape(-1)
    if pad:
        flat_out = flat_out[: 2 * B]
    return flat_out.reshape(B, 2)


def _reference(x, W1, W2):
    x = x.astype(jnp.float32)
    z = jnp.concatenate([x, jnp.ones((x.shape[0], 1), jnp.float32)], axis=1)
    n1 = jnp.einsum("bi,ij,bj->b", z, W1.astype(jnp.float32), z)
    n2 = jnp.einsum("bi,ij,bj->b", z, W2.astype(jnp.float32), z)
    return jnp.stack([n1, n2], axis=1)


if __name__ == "__main__":
    key = jax.random.PRNGKey(0)
    kx, kw1, kw2, kx2 = jax.random.split(key, 4)

    # Deterministic parameter init (torch.randn(3, 3) analogue).
    W1 = jax.random.normal(kw1, (3, 3), dtype=jnp.float32)
    W2 = jax.random.normal(kw2, (3, 3), dtype=jnp.float32)

    # Small batch consistent with the module's (B, 2) input; force the Pallas
    # path so the kernel itself is exercised.
    B = 8
    x = jax.random.normal(kx, (B, 2), dtype=jnp.float32)
    out = jax.block_until_ready(
        polynomial_width2_forward(x, W1, W2, use_pallas=True))
    assert out.shape == (B, 2)
    assert jnp.allclose(out, _reference(x, W1, W2), atol=1e-4, rtol=1e-4)

    # A second shape exercising lane padding of the batch axis.
    B2 = 389
    xb = jax.random.normal(kx2, (B2, 2), dtype=jnp.float32)
    out2 = jax.block_until_ready(
        polynomial_width2_forward(xb, W1, W2, use_pallas=True))
    assert out2.shape == (B2, 2)
    assert jnp.allclose(out2, _reference(xb, W1, W2), atol=1e-4, rtol=1e-4)

    # Auto-dispatch (tiny batch -> fused jnp fallback) stays consistent too.
    out3 = jax.block_until_ready(polynomial_width2_forward(x, W1, W2))
    assert jnp.allclose(out3, out, atol=1e-5, rtol=1e-5)

    print("KERNEL_OK")
</pallas_src>

<mosaic_0001>
module attributes {stable_mosaic.version = 11 : i64} {
  func.func @poly_width2_kernel(%arg0: i32, %arg1: memref<12xf32, #tpu.memory_space<smem>>, %arg2: memref<8x256xf32, #tpu.memory_space<vmem>>, %arg3: memref<8x256xf32, #tpu.memory_space<vmem>>) attributes {dimension_semantics = [#tpu.dimension_semantics<parallel>], iteration_bounds = array<i64: 1>, scalar_prefetch = 0 : i64, scratch_operands = 0 : i64, tpu.core_type = #tpu.core_type<tc>, window_params = [{transform_indices = @transform_0, window_bounds = array<i64: 12>}, {transform_indices = @transform_1, window_bounds = array<i64: 8, 256>}, {transform_indices = @transform_2, window_bounds = array<i64: 8, 256>}]} {
    %c0 = arith.constant 0 : index
    %c0_0 = arith.constant 0 : index
    %0 = vector.load %arg2[%c0, %c0_0] : memref<8x256xf32, #tpu.memory_space<vmem>>, vector<8x256xf32>
    %c0_1 = arith.constant 0 : index
    %1 = memref.load %arg1[%c0_1] : memref<12xf32, #tpu.memory_space<smem>>
    %c1 = arith.constant 1 : index
    %2 = memref.load %arg1[%c1] : memref<12xf32, #tpu.memory_space<smem>>
    %c2 = arith.constant 2 : index
    %3 = memref.load %arg1[%c2] : memref<12xf32, #tpu.memory_space<smem>>
    %c3 = arith.constant 3 : index
    %4 = memref.load %arg1[%c3] : memref<12xf32, #tpu.memory_space<smem>>
    %c4 = arith.constant 4 : index
    %5 = memref.load %arg1[%c4] : memref<12xf32, #tpu.memory_space<smem>>
    %c5 = arith.constant 5 : index
    %6 = memref.load %arg1[%c5] : memref<12xf32, #tpu.memory_space<smem>>
    %c6 = arith.constant 6 : index
    %7 = memref.load %arg1[%c6] : memref<12xf32, #tpu.memory_space<smem>>
    %c7 = arith.constant 7 : index
    %8 = memref.load %arg1[%c7] : memref<12xf32, #tpu.memory_space<smem>>
    %c8 = arith.constant 8 : index
    %9 = memref.load %arg1[%c8] : memref<12xf32, #tpu.memory_space<smem>>
    %c9 = arith.constant 9 : index
    %10 = memref.load %arg1[%c9] : memref<12xf32, #tpu.memory_space<smem>>
    %c10 = arith.constant 10 : index
    %11 = memref.load %arg1[%c10] : memref<12xf32, #tpu.memory_space<smem>>
    %c11 = arith.constant 11 : index
    %12 = memref.load %arg1[%c11] : memref<12xf32, #tpu.memory_space<smem>>
    %c1_i32 = arith.constant 1 : i32
    %13 = tpu.dynamic_rotate %0 by %c1_i32 dim 1 : vector<8x256xf32>, i32 -> vector<8x256xf32>
    %c255_i32 = arith.constant 255 : i32
    %14 = tpu.dynamic_rotate %0 by %c255_i32 dim 1 : vector<8x256xf32>, i32 -> vector<8x256xf32>
    %15 = vector.broadcast %1 : f32 to vector<8x256xf32>
    %16 = arith.mulf %15, %0 : vector<8x256xf32>
    %17 = vector.broadcast %2 : f32 to vector<8x256xf32>
    %18 = arith.mulf %17, %14 : vector<8x256xf32>
    %19 = arith.addf %16, %18 : vector<8x256xf32>
    %20 = vector.broadcast %4 : f32 to vector<8x256xf32>
    %21 = arith.addf %19, %20 : vector<8x256xf32>
    %22 = arith.mulf %21, %0 : vector<8x256xf32>
    %23 = vector.broadcast %3 : f32 to vector<8x256xf32>
    %24 = arith.mulf %23, %14 : vector<8x256xf32>
    %25 = vector.broadcast %5 : f32 to vector<8x256xf32>
    %26 = arith.addf %24, %25 : vector<8x256xf32>
    %27 = arith.mulf %26, %14 : vector<8x256xf32>
    %28 = arith.addf %22, %27 : vector<8x256xf32>
    %29 = vector.broadcast %6 : f32 to vector<8x256xf32>
    %30 = arith.addf %28, %29 : vector<8x256xf32>
    %31 = vector.broadcast %7 : f32 to vector<8x256xf32>
    %32 = arith.mulf %31, %13 : vector<8x256xf32>
    %33 = vector.broadcast %8 : f32 to vector<8x256xf32>
    %34 = arith.mulf %33, %0 : vector<8x256xf32>
    %35 = arith.addf %32, %34 : vector<8x256xf32>
    %36 = vector.broadcast %10 : f32 to vector<8x256xf32>
    %37 = arith.addf %35, %36 : vector<8x256xf32>
    %38 = arith.mulf %37, %13 : vector<8x256xf32>
    %39 = vector.broadcast %9 : f32 to vector<8x256xf32>
    %40 = arith.mulf %39, %0 : vector<8x256xf32>
    %41 = vector.broadcast %11 : f32 to vector<8x256xf32>
    %42 = arith.addf %40, %41 : vector<8x256xf32>
    %43 = arith.mulf %42, %0 : vector<8x256xf32>
    %44 = arith.addf %38, %43 : vector<8x256xf32>
    %45 = vector.broadcast %12 : f32 to vector<8x256xf32>
    %46 = arith.addf %44, %45 : vector<8x256xf32>
    %47 = tpu.iota {dimensions = array<i32: 1>} : vector<8x256xi32>
    %c2_i32 = arith.constant 2 : i32
    %c0_i32 = arith.constant 0 : i32
    %48 = arith.cmpi eq, %c2_i32, %c0_i32 : i32
    %c1_i32_2 = arith.constant 1 : i32
    %49 = arith.select %48, %c1_i32_2, %c2_i32 : i32
    %50 = vector.broadcast %49 : i32 to vector<8x256xi32>
    %51 = arith.remsi %47, %50 : vector<8x256xi32>
    %c0_i32_3 = arith.constant 0 : i32
    %52 = vector.broadcast %c0_i32_3 : i32 to vector<8x256xi32>
    %53 = arith.cmpi ne, %51, %52 : vector<8x256xi32>
    %c0_i32_4 = arith.constant 0 : i32
    %54 = vector.broadcast %c0_i32_4 : i32 to vector<8x256xi32>
    %55 = arith.cmpi slt, %51, %54 : vector<8x256xi32>
    %c0_i32_5 = arith.constant 0 : i32
    %56 = arith.cmpi slt, %49, %c0_i32_5 : i32
    %57 = vector.broadcast %56 : i1 to vector<8x256xi1>
    %58 = vector.broadcast %57 : vector<8x256xi1> to vector<8x256xi1>
    %59 = arith.xori %55, %58 : vector<8x256xi1>
    %60 = arith.andi %59, %53 : vector<8x256xi1>
    %61 = vector.broadcast %49 : i32 to vector<8x256xi32>
    %62 = arith.addi %51, %61 : vector<8x256xi32>
    %63 = arith.select %60, %62, %51 : vector<8x256xi1>, vector<8x256xi32>
    %c0_i32_6 = arith.constant 0 : i32
    %64 = vector.broadcast %c0_i32_6 : i32 to vector<8x256xi32>
    %65 = arith.cmpi eq, %63, %64 : vector<8x256xi32>
    %66 = arith.select %65, %30, %46 : vector<8x256xi1>, vector<8x256xf32>
    %c0_7 = arith.constant 0 : index
    %c0_8 = arith.constant 0 : index
    %67 = vector.load %arg3[%c0_7, %c0_8] : memref<8x256xf32, #tpu.memory_space<vmem>>, vector<8x256xf32>
    tpu.vector_store %arg3[%c0_7, %c0_8], %66 {strides = array<i32>} : memref<8x256xf32, #tpu.memory_space<vmem>>, vector<8x256xf32>,
    return
  }
  func.func @transform_0(%arg0: i32) -> i32 {
    %c0_i32 = arith.constant 0 : i32
    %c0_i32_0 = arith.constant 0 : i32
    return %c0_i32 : i32
  }
  func.func @transform_1(%arg0: i32) -> (i32, i32) {
    %c0_i32 = arith.constant 0 : i32
    %c0_i32_0 = arith.constant 0 : i32
    return %arg0, %c0_i32 : i32, i32
  }
  func.func @transform_2(%arg0: i32) -> (i32, i32) {
    %c0_i32 = arith.constant 0 : i32
    %c0_i32_0 = arith.constant 0 : i32
    return %arg0, %c0_i32 : i32, i32
  }
}

</mosaic_0001>

<llo_original>
// kernel: tpu_custom_call.1
$region0: #{tpu_custom_call.1}
  #allocation0 [shape = 'u32[]', space=smem, size = 0x4, offset = 0x4, fixed_abs, tag = 'smem constant byte address 0x4 - core index']
  #allocation1 [shape = 'u32[144,128]{1,0:T(1,128)}', space=vmem, size = 0x12000, scoped, tag = 'internal scratch']
  %s0 = inlined_call_operand.hbm [shape: f32[12], index: 0, kind: input, shape index: {}]
  %s1 = inlined_call_operand.hbm [shape: f32[8,256], index: 1, kind: input, shape index: {}]
  %s2 = inlined_call_operand.hbm [shape: f32[8,256], index: 2, kind: output, shape index: {}]
  %s3 = sld [smem:[#allocation0]]
  $region26: #{tpu_custom_call.1} parent=0
    _
  %s5 = ssub.s32 1, %s3
  %s6 = scalar_select 0, %s5, %s3
  $region1: #{tpu_custom_call.1} parent=0
    #allocation2 [shape = 'u8[512]{0}', space=smem, size = 0x200, scoped, tag = 'input window, operand 0, single buffered']
    #allocation3 [shape = 's32[1]{0}', space=sflag, size = 0x4, scoped, tag = 'scoped memory for tpu_custom_call.1']
    #allocation4 [shape = 's32[1]{0}', space=sflag, size = 0x4, scoped, tag = 'scoped memory for tpu_custom_call.1']
    #allocation5 [shape = 's32[1]{0}', space=sflag, size = 0x4, scoped, tag = 'scoped memory for tpu_custom_call.1']
    #allocation6 [shape = 'u8[8192]{0}', space=vmem, size = 0x2000, scoped, tag = 'input window, operand 1, single buffered']
    #allocation7 [shape = 'u8[8192]{0}', space=vmem, size = 0x2000, scoped, tag = 'output window, operand 0, single buffered']
    %7 = vsyncpa [#allocation5], 0
    %8 = vsyncpa [#allocation3], 0
    %9 = vsyncpa [#allocation4], 0
    // Predicated region
    $region2: #{tpu_custom_call.1} parent=1 // pred_check
      _
    $region3: #{tpu_custom_call.1} parent=1 // pred_check_branch
      %11 = sbr.rel (0) target = $region5
    $region4: #{tpu_custom_call.1} parent=1 // pred_region
      %s13 = ssub.s32 16, 16
      %14 = vsyncadd [#allocation5], %s13
      %17 = dma.hbm_to_smem %s0, 16, [#allocation2], [#allocation5]
    $region5: #{tpu_custom_call.1} parent=1 // pred_fallthru
      _
    // Predicated region
    $region6: #{tpu_custom_call.1} parent=1 // pred_check
      _
    $region7: #{tpu_custom_call.1} parent=1 // pred_check_branch
      %19 = sbr.rel (0) target = $region9
    $region8: #{tpu_custom_call.1} parent=1 // pred_region
      %s21 = ssub.s32 256, 256
      %22 = vsyncadd [#allocation3], %s21
      %s24 = sshll.u32 [#allocation6], 4
      %s25 = int_to_ptr.vmem [resolvable:$true] %s24
      %27 = dma.hbm_to_vmem [thread:$0]  %s1, 256, %s25, [#allocation3]
    $region9: #{tpu_custom_call.1} parent=1 // pred_fallthru
      _
    // Predicated region
    $region10: #{tpu_custom_call.1} parent=1 // pred_check
      _
    $region11: #{tpu_custom_call.1} parent=1 // pred_check_branch
      %29 = sbr.rel (0) target = $region13
    $region12: #{tpu_custom_call.1} parent=1 // pred_region
      %30 = dma.done [#allocation5], 16
    $region13: #{tpu_custom_call.1} parent=1 // pred_fallthru
      _
    // Predicated region
    $region14: #{tpu_custom_call.1} parent=1 // pred_check
      _
    $region15: #{tpu_custom_call.1} parent=1 // pred_check_branch
      %32 = sbr.rel (0) target = $region17
    $region16: #{tpu_custom_call.1} parent=1 // pred_region
      %33 = dma.done [#allocation3], 256
    $region17: #{tpu_custom_call.1} parent=1 // pred_fallthru
      _
    %34 = sfence
    %v35 = vld [vmem:[#allocation6] sm:$0xff]
    %v36 = vld [vmem:[#allocation6 + $0x8] sm:$0xff]
    %s37 = sld [smem:[#allocation2]]
    %s38 = sld [smem:[#allocation2 + $0x1]]
    %s39 = sld [smem:[#allocation2 + $0x2]]
    %s40 = sld [smem:[#allocation2 + $0x3]]
    %s41 = sld [smem:[#allocation2 + $0x4]]
    %s42 = sld [smem:[#allocation2 + $0x5]]
    %s43 = sld [smem:[#allocation2 + $0x6]]
    %s44 = sld [smem:[#allocation2 + $0x7]]
    %s45 = sld [smem:[#allocation2 + $0x8]]
    %s46 = sld [smem:[#allocation2 + $0x9]]
    %s47 = sld [smem:[#allocation2 + $0xa]]
    %s48 = sld [smem:[#allocation2 + $0xb]]
    %49 = vrot.lane.b32.xlu0 %v35, 1
    %v50 = vpop.permute.xlu0 %49
    %51 = vrot.lane.b32.xlu0 %v36, 1
    %v52 = vpop.permute.xlu0 %51
    %v53 = vlaneseq
    %v54 = vand.u32 %v53, 127
    %vm55 = vcmp.lt.s32.totalorder %v54, 1
    %v56 = vsel %vm55, %v50, %v52
    %v57 = vsel %vm55, %v52, %v50
    %58 = vrot.lane.b32.xlu0 %v35, 127
    %v59 = vpop.permute.xlu0 %58
    %60 = vrot.lane.b32.xlu0 %v36, 127
    %v61 = vpop.permute.xlu0 %60
    %vm62 = vcmp.lt.s32.totalorder %v54, 127
    %v63 = vsel %vm62, %v59, %v61
    %v64 = vsel %vm62, %v61, %v59
    %v65 = vstv %s37
    %v66 = vmul.f32 %v65, %v35
    %v67 = vmul.f32 %v65, %v36
    %v68 = vstv %s38
    %v69 = vmul.f32 %v68, %v63
    %v70 = vmul.f32 %v68, %v64
    %v71 = vadd.f32 %v66, %v69
    %v72 = vadd.f32 %v67, %v70
    %v73 = vstv %s40
    %v74 = vadd.f32 %v71, %v73
    %v75 = vadd.f32 %v72, %v73
    %v76 = vmul.f32 %v74, %v35
    %v77 = vmul.f32 %v75, %v36
    %v78 = vstv %s39
    %v79 = vmul.f32 %v78, %v63
    %v80 = vmul.f32 %v78, %v64
    %v81 = vstv %s41
    %v82 = vadd.f32 %v79, %v81
    %v83 = vadd.f32 %v80, %v81
    %v84 = vmul.f32 %v82, %v63
    %v85 = vmul.f32 %v83, %v64
    %v86 = vadd.f32 %v76, %v84
    %v87 = vadd.f32 %v77, %v85
    %v88 = vstv %s42
    %v89 = vadd.f32 %v86, %v88
    %v90 = vadd.f32 %v87, %v88
    %v91 = vstv %s43
    %v92 = vmul.f32 %v91, %v57
    %v93 = vmul.f32 %v91, %v56
    %v94 = vstv %s44
    %v95 = vmul.f32 %v94, %v35
    %v96 = vmul.f32 %v94, %v36
    %v97 = vadd.f32 %v92, %v95
    %v98 = vadd.f32 %v93, %v96
    %v99 = vstv %s46
    %v100 = vadd.f32 %v97, %v99
    %v101 = vadd.f32 %v98, %v99
    %v102 = vmul.f32 %v100, %v57
    %v103 = vmul.f32 %v101, %v56
    %v104 = vstv %s45
    %v105 = vmul.f32 %v104, %v35
    %v106 = vmul.f32 %v104, %v36
    %v107 = vstv %s47
    %v108 = vadd.f32 %v105, %v107
    %v109 = vadd.f32 %v106, %v107
    %v110 = vmul.f32 %v108, %v35
    %v111 = vmul.f32 %v109, %v36
    %v112 = vadd.f32 %v102, %v110
    %v113 = vadd.f32 %v103, %v111
    %v114 = vstv %s48
    %v115 = vadd.f32 %v112, %v114
    %v116 = vadd.f32 %v113, %v114
    %v117 = vadd.s32 %v54, 128
    %vm118 = vcmp.lt.s32.totalorder %v54, 0
    %v119 = vsub.s32 0, %v54
    %v120 = vsel %vm118, %v119, %v54
    %v121 = vshrl.u32 %v120, 1
    %v122 = vand.u32 %v120, 1
    %v123 = vsub.s32 0, %v122
    %v124 = vsel %vm118, %v123, %v122
    %vm125 = vcmp.lt.s32.totalorder %v117, 0
    %v126 = vsub.s32 0, %v117
    %v127 = vsel %vm125, %v126, %v117
    %v128 = vshrl.u32 %v127, 1
    %v129 = vand.u32 %v127, 1
    %v130 = vsub.s32 0, %v129
    %v131 = vsel %vm125, %v130, %v129
    %vm132 = vcmp.ne.s32.totalorder %v124, 0
    %vm133 = vcmp.ne.s32.totalorder %v131, 0
    %vm134 = vcmp.lt.s32.totalorder %v124, 0
    %vm135 = vcmp.lt.s32.totalorder %v131, 0
    %vm136 = vmand %vm134, %vm132
    %vm137 = vmand %vm135, %vm133
    %v138 = vadd.s32 %v124, 2
    %v139 = vadd.s32 %v131, 2
    %v140 = vsel %vm136, %v138, %v124
    %v141 = vsel %vm137, %v139, %v131
    %vm142 = vcmp.eq.s32.totalorder %v140, 0
    %vm143 = vcmp.eq.s32.totalorder %v141, 0
    %v144 = vsel %vm142, %v89, %v115
    %v145 = vsel %vm143, %v90, %v116
    %146 = vst [vmem:[#allocation7] sm:$0xff] %v144
    %147 = vst [vmem:[#allocation7 + $0x8] sm:$0xff] %v145
    // Predicated region
    $region18: #{tpu_custom_call.1} parent=1 // pred_check
      _
    $region19: #{tpu_custom_call.1} parent=1 // pred_check_branch
      %149 = sbr.rel (0) target = $region21
    $region20: #{tpu_custom_call.1} parent=1 // pred_region
      %s151 = ssub.s32 256, 256
      %152 = vsyncadd [#allocation4], %s151
      %s154 = sshll.u32 [#allocation7], 4
      %s155 = int_to_ptr.vmem [resolvable:$true] %s154
      %157 = dma.vmem_to_hbm [thread:$0]  %s155, 256, %s2, [#allocation4]
    $region21: #{tpu_custom_call.1} parent=1 // pred_fallthru
      _
    // Predicated region
    $region22: #{tpu_custom_call.1} parent=1 // pred_check
      _
    $region23: #{tpu_custom_call.1} parent=1 // pred_check_branch
      %159 = sbr.rel (0) target = $region25
    $region24: #{tpu_custom_call.1} parent=1 // pred_region
      %160 = dma.done [#allocation4], 256
    $region25: #{tpu_custom_call.1} parent=1 // pred_fallthru
      _
    %161 = vsyncpa [#allocation3], 1
    %162 = vsyncpa [#allocation4], 1
    %163 = vsyncpa [#allocation5], 1

</llo_original>
